<compile_context>
chip_gen: v7x
topology: tpu7x:2x2x1
jax: 0.10.0
libtpu: 0.0.40
codegen_flags: <defaults>
</compile_context>

<pallas_src>
import functools

import numpy as np
import jax
import jax.numpy as jnp
from jax.experimental import pallas as pl
from jax.experimental.pallas import tpu as pltpu

# ----- small synthetic VLM config (consistent with the module's __init__) -----
IMAGE_SIZE = 64
PATCH_SIZE = 8
TOKENS_PER_IMAGE = 16
VISION_HIDDEN = 32
HIDDEN = 64
BATCH = 2

PATCHES_PER_IMAGE = IMAGE_SIZE // PATCH_SIZE            # 8
TOKENS_PER_SIDE = int(TOKENS_PER_IMAGE ** 0.5)          # 4
KERNEL_SIZE = PATCHES_PER_IMAGE // TOKENS_PER_SIDE      # 2  (AvgPool2d k=stride=2)
NUM_PATCHES = PATCHES_PER_IMAGE * PATCHES_PER_IMAGE     # 64
NUM_TOKENS = TOKENS_PER_SIDE * TOKENS_PER_SIDE          # 16
EPS = 1e-6                                              # RMSNorm eps


@functools.lru_cache(maxsize=None)
def _pool_matrix_np():
    """(num_tokens, num_patches) matrix implementing AvgPool2d(k, stride=k)
    over the PxP patch grid, in the (N, V) sequence layout."""
    P, T, K = PATCHES_PER_IMAGE, TOKENS_PER_SIDE, KERNEL_SIZE
    M = np.zeros((T * T, P * P), dtype=np.float32)
    for ti in range(T):
        for tj in range(T):
            t = ti * T + tj
            for dr in range(K):
                for dc in range(K):
                    n = (ti * K + dr) * P + (tj * K + dc)
                    M[t, n] = 1.0 / (K * K)
    return M


@functools.lru_cache(maxsize=None)
def _block_diag_pool_np(batch):
    """Block-diagonal (batch*TT, batch*N) pooling matrix: pools every batch
    element with a single MXU matmul on row-stacked patches.
    # TODO(synk): at realistic N (~4096 patches) this dense 4-sparse-per-row
    # matrix wastes HBM/MXU; switch to VPU strided-row pooling there."""
    M = _pool_matrix_np()
    TT, N = M.shape
    out = np.zeros((batch * TT, batch * N), dtype=np.float32)
    for b in range(batch):
        out[b * TT:(b + 1) * TT, b * N:(b + 1) * N] = M
    return out


def projector_kernel(pool_ref, x_ref, w_ref, o_ref):
    # Static shapes: pool (B*TT, B*N), x (B*N, V), w (V, B*H), o (TT, B*H).
    tt, bh = o_ref.shape
    btt = pool_ref.shape[0]
    b = btt // tt
    h = bh // b

    # Pooling for all batches in one MXU matmul: (B*TT, B*N) @ (B*N, V).
    pooled = jnp.dot(pool_ref[...], x_ref[...],
                     preferred_element_type=jnp.float32)          # (B*TT, V)

    # RMSNorm over the vision-hidden axis (f32 math); the Gemma-style
    # (1 + gamma) scale is pre-folded into the projection weight.
    ms = jnp.mean(pooled * pooled, axis=-1, keepdims=True)        # XLU reduce
    normed = pooled * jax.lax.rsqrt(ms + EPS)                     # EUP rsqrt

    # Projection against the column-tiled weight: (B*TT, V) @ (V, B*H).
    # Every H-wide column block of `proj` holds the same per-row projection,
    # so the diagonal-block pick below is just a lane select.
    proj = jnp.dot(normed, w_ref[...], preferred_element_type=jnp.float32)

    # Lane-dense (TT, B*H) output: batch bi's tokens live in row block
    # [bi*TT, (bi+1)*TT); lane-select them into column block bi.  All row
    # slices are sublane-tile aligned and the final store is a full
    # 128-lane-multiple unmasked vst.
    lane = jax.lax.broadcasted_iota(jnp.int32, (tt, bh), 1)
    out = proj[:tt, :]
    for bi in range(1, b):
        out = jnp.where(lane >= bi * h, proj[bi * tt:(bi + 1) * tt, :], out)
    o_ref[...] = out.astype(o_ref.dtype)


@jax.jit
def multimodal_projector(vision_outputs, rms_gamma, proj_weight):
    B, N, V = vision_outputs.shape
    H = proj_weight.shape[1]
    TT = NUM_TOKENS

    # One-time parameter folds (tiny XLA ops / constants under jit):
    #  * RMSNorm (1+gamma) commutes into W:  (x*(1+g)) @ W == x @ (diag(1+g) W)
    #  * W tiled along columns to B*H so the projection output is lane-dense.
    w_fused = proj_weight * (1.0 + rms_gamma.reshape(V, 1))          # (V, H)
    w_wide = jnp.tile(w_fused, (1, B))                               # (V, B*H)
    # TODO(synk): if production activations are bf16, keep x/pool/w bf16 here
    # (MXU is bf16-native) and leave only the RMSNorm math in f32.

    pool_bd = jnp.asarray(_block_diag_pool_np(int(B)))               # (B*TT, B*N)
    x_flat = vision_outputs.reshape(B * N, V)                        # free reshape

    # TODO(synk): at realistic VLM dims (N~4096, V~1152, H>=2048) add a
    # contraction-axis grid dim + f32 VMEM accumulator and set vmem_limit_bytes
    # (v7x has only 64 MiB VMEM); whole-array blocks are fine at toy size.
    out_flat = pl.pallas_call(
        projector_kernel,
        out_shape=jax.ShapeDtypeStruct((TT, B * H), vision_outputs.dtype),
        grid=(1,),   # single program: everything is VMEM-resident
        in_specs=[
            pl.BlockSpec((B * TT, B * N), lambda i: (0, 0)),  # block-diag pool
            pl.BlockSpec((B * N, V), lambda i: (0, 0)),       # row-stacked patches
            pl.BlockSpec((V, B * H), lambda i: (0, 0)),       # fused, tiled weight
        ],
        out_specs=pl.BlockSpec((TT, B * H), lambda i: (0, 0)),
        compiler_params=pltpu.CompilerParams(dimension_semantics=("arbitrary",)),
    )(pool_bd, x_flat, w_wide)

    # Layout plumbing back to (B, TT, H): tiny XLA reshape/transpose outside
    # the kernel (presenting a lane-dense kernel output, then unpacking it).
    return out_flat.reshape(TT, B, H).transpose(1, 0, 2)


if __name__ == "__main__":
    key = jax.random.PRNGKey(0)
    k1, k2, k3 = jax.random.split(key, 3)

    # deterministic synthetic inputs / parameters
    x = jax.random.normal(k1, (BATCH, NUM_PATCHES, VISION_HIDDEN), dtype=jnp.float32)
    rms_gamma = 0.1 * jax.random.normal(k2, (1, VISION_HIDDEN), dtype=jnp.float32)
    proj_weight = (jax.random.normal(k3, (VISION_HIDDEN, HIDDEN), dtype=jnp.float32)
                   / np.sqrt(VISION_HIDDEN))

    out = multimodal_projector(x, rms_gamma, proj_weight)
    out = jax.block_until_ready(out)

    # pure-JAX reference of the PyTorch forward (NCHW reshape + AvgPool2d +
    # RMSNorm with (1+gamma) scale + matmul)
    xr = x.transpose(0, 2, 1).reshape(BATCH, VISION_HIDDEN,
                                      PATCHES_PER_IMAGE, PATCHES_PER_IMAGE)
    pooled = xr.reshape(BATCH, VISION_HIDDEN, TOKENS_PER_SIDE, KERNEL_SIZE,
                        TOKENS_PER_SIDE, KERNEL_SIZE).mean(axis=(3, 5))
    pooled = pooled.reshape(BATCH, VISION_HIDDEN, NUM_TOKENS).transpose(0, 2, 1)
    normed = pooled * jax.lax.rsqrt(jnp.mean(pooled ** 2, axis=-1, keepdims=True) + EPS)
    normed = normed * (1.0 + rms_gamma[0])
    ref = normed @ proj_weight

    assert out.shape == (BATCH, NUM_TOKENS, HIDDEN), out.shape
    assert jnp.allclose(out, ref, atol=1e-4, rtol=1e-4), float(jnp.max(jnp.abs(out - ref)))
    print("KERNEL_OK")
</pallas_src>

<mosaic_0001>
module attributes {stable_mosaic.version = 11 : i64} {
  func.func @projector_kernel(%arg0: i32, %arg1: memref<32x128xf32, #tpu.memory_space<vmem>>, %arg2: memref<128x32xf32, #tpu.memory_space<vmem>>, %arg3: memref<32x128xf32, #tpu.memory_space<vmem>>, %arg4: memref<16x128xf32, #tpu.memory_space<vmem>>) attributes {dimension_semantics = [#tpu.dimension_semantics<arbitrary>], iteration_bounds = array<i64: 1>, scalar_prefetch = 0 : i64, scratch_operands = 0 : i64, tpu.core_type = #tpu.core_type<tc>, window_params = [{pipeline_mode = #tpu.pipeline_mode<synchronous>, transform_indices = @transform_0, window_bounds = array<i64: 32, 128>}, {pipeline_mode = #tpu.pipeline_mode<synchronous>, transform_indices = @transform_1, window_bounds = array<i64: 128, 32>}, {pipeline_mode = #tpu.pipeline_mode<synchronous>, transform_indices = @transform_2, window_bounds = array<i64: 32, 128>}, {pipeline_mode = #tpu.pipeline_mode<synchronous>, transform_indices = @transform_3, window_bounds = array<i64: 16, 128>}]} {
    %c0 = arith.constant 0 : index
    %c0_0 = arith.constant 0 : index
    %0 = vector.load %arg1[%c0, %c0_0] : memref<32x128xf32, #tpu.memory_space<vmem>>, vector<32x128xf32>
    %c0_1 = arith.constant 0 : index
    %c0_2 = arith.constant 0 : index
    %1 = vector.load %arg2[%c0_1, %c0_2] : memref<128x32xf32, #tpu.memory_space<vmem>>, vector<128x32xf32>
    %cst = arith.constant dense<0.000000e+00> : vector<32x32xf32>
    %2 = tpu.matmul %0, %1, %cst {dimension_numbers = #tpu.dot_dimension_numbers<[1], [0], [0], [1], [0, 0, 1, 1], [], []>} : vector<32x128xf32>, vector<128x32xf32>, vector<32x32xf32> -> vector<32x32xf32>
    %3 = arith.mulf %2, %2 : vector<32x32xf32>
    %cst_3 = arith.constant dense<0.000000e+00> : vector<32xf32>
    %4 = vector.multi_reduction <add>, %3, %cst_3 [1] : vector<32x32xf32> to vector<32xf32>
    %5 = vector.shape_cast %4 : vector<32xf32> to vector<32x1xf32>
    %cst_4 = arith.constant 3.200000e+01 : f32
    %6 = vector.broadcast %cst_4 : f32 to vector<32x1xf32>
    %7 = arith.divf %5, %6 : vector<32x1xf32>
    %cst_5 = arith.constant 9.99999997E-7 : f32
    %8 = vector.broadcast %cst_5 : f32 to vector<32x1xf32>
    %9 = arith.addf %7, %8 : vector<32x1xf32>
    %10 = math.rsqrt %9 : vector<32x1xf32>
    %11 = vector.broadcast %10 : vector<32x1xf32> to vector<32x32xf32>
    %12 = arith.mulf %2, %11 : vector<32x32xf32>
    %c0_6 = arith.constant 0 : index
    %c0_7 = arith.constant 0 : index
    %13 = vector.load %arg3[%c0_6, %c0_7] : memref<32x128xf32, #tpu.memory_space<vmem>>, vector<32x128xf32>
    %cst_8 = arith.constant dense<0.000000e+00> : vector<32x128xf32>
    %14 = tpu.matmul %12, %13, %cst_8 {dimension_numbers = #tpu.dot_dimension_numbers<[1], [0], [0], [1], [0, 0, 1, 1], [], []>} : vector<32x32xf32>, vector<32x128xf32>, vector<32x128xf32> -> vector<32x128xf32>
    %15 = tpu.iota {dimensions = array<i32: 1>} : vector<16x128xi32>
    %16 = vector.extract_strided_slice %14 {offsets = [0, 0], sizes = [16, 128], strides = [1, 1]} : vector<32x128xf32> to vector<16x128xf32>
    %c64_i32 = arith.constant 64 : i32
    %17 = vector.broadcast %c64_i32 : i32 to vector<16x128xi32>
    %18 = arith.cmpi sge, %15, %17 : vector<16x128xi32>
    %19 = vector.extract_strided_slice %14 {offsets = [16, 0], sizes = [16, 128], strides = [1, 1]} : vector<32x128xf32> to vector<16x128xf32>
    %20 = arith.select %18, %19, %16 : vector<16x128xi1>, vector<16x128xf32>
    %c0_9 = arith.constant 0 : index
    %c0_10 = arith.constant 0 : index
    %21 = vector.load %arg4[%c0_9, %c0_10] : memref<16x128xf32, #tpu.memory_space<vmem>>, vector<16x128xf32>
    tpu.vector_store %arg4[%c0_9, %c0_10], %20 {strides = array<i32>} : memref<16x128xf32, #tpu.memory_space<vmem>>, vector<16x128xf32>,
    return
  }
  func.func @transform_0(%arg0: i32) -> (i32, i32) {
    %c0_i32 = arith.constant 0 : i32
    %c0_i32_0 = arith.constant 0 : i32
    %c0_i32_1 = arith.constant 0 : i32
    return %c0_i32, %c0_i32_0 : i32, i32
  }
  func.func @transform_1(%arg0: i32) -> (i32, i32) {
    %c0_i32 = arith.constant 0 : i32
    %c0_i32_0 = arith.constant 0 : i32
    %c0_i32_1 = arith.constant 0 : i32
    return %c0_i32, %c0_i32_0 : i32, i32
  }
  func.func @transform_2(%arg0: i32) -> (i32, i32) {
    %c0_i32 = arith.constant 0 : i32
    %c0_i32_0 = arith.constant 0 : i32
    %c0_i32_1 = arith.constant 0 : i32
    return %c0_i32, %c0_i32_0 : i32, i32
  }
  func.func @transform_3(%arg0: i32) -> (i32, i32) {
    %c0_i32 = arith.constant 0 : i32
    %c0_i32_0 = arith.constant 0 : i32
    %c0_i32_1 = arith.constant 0 : i32
    return %c0_i32, %c0_i32_0 : i32, i32
  }
}

</mosaic_0001>

<llo_original>
// kernel: tile.9
$region0: #{tile.9}
  %s0 = inlined_call_operand.vmem [shape: f32[32,2,64], index: 0, kind: input, shape index: {}]
  %s1 = inlined_call_operand.vmem [shape: f32[32,128], index: 1, kind: output, shape index: {}]
  $region1: #{tile.9} parent=0
    #allocation0 [shape = 'u8[131072]{0}', space=vmem, size = 0x20000, scoped, tag = 'scoped mem for input reshape']
    %s3 = sshllo.u32 0, 2
    %s4 = smul.addr 2, 31
    %s5 = scalar_lea.vmem %s0, %s4
    %v6 = vld [vmem:[%s5] sm:%s3]
    %s7 = scalar_lea.vmem [#allocation0], 248
    %8 = vst [vmem:[%s7] sm:%s3] %v6
    %s9 = smul.addr 2, 30
    %s10 = scalar_lea.vmem %s0, %s9
    %v11 = vld [vmem:[%s10] sm:%s3]
    %s12 = scalar_lea.vmem [#allocation0], 240
    %13 = vst [vmem:[%s12] sm:%s3] %v11
    %s14 = smul.addr 2, 29
    %s15 = scalar_lea.vmem %s0, %s14
    %v16 = vld [vmem:[%s15] sm:%s3]
    %s17 = scalar_lea.vmem [#allocation0], 232
    %18 = vst [vmem:[%s17] sm:%s3] %v16
    %s19 = smul.addr 2, 28
    %s20 = scalar_lea.vmem %s0, %s19
    %v21 = vld [vmem:[%s20] sm:%s3]
    %s22 = scalar_lea.vmem [#allocation0], 224
    %23 = vst [vmem:[%s22] sm:%s3] %v21
    %s24 = smul.addr 2, 27
    %s25 = scalar_lea.vmem %s0, %s24
    %v26 = vld [vmem:[%s25] sm:%s3]
    %s27 = scalar_lea.vmem [#allocation0], 216
    %28 = vst [vmem:[%s27] sm:%s3] %v26
    %s29 = smul.addr 2, 26
    %s30 = scalar_lea.vmem %s0, %s29
    %v31 = vld [vmem:[%s30] sm:%s3]
    %s32 = scalar_lea.vmem [#allocation0], 208
    %33 = vst [vmem:[%s32] sm:%s3] %v31
    %s34 = smul.addr 2, 25
    %s35 = scalar_lea.vmem %s0, %s34
    %v36 = vld [vmem:[%s35] sm:%s3]
    %s37 = scalar_lea.vmem [#allocation0], 200
    %38 = vst [vmem:[%s37] sm:%s3] %v36
    %s39 = smul.addr 2, 24
    %s40 = scalar_lea.vmem %s0, %s39
    %v41 = vld [vmem:[%s40] sm:%s3]
    %s42 = scalar_lea.vmem [#allocation0], 192
    %43 = vst [vmem:[%s42] sm:%s3] %v41
    %s44 = smul.addr 2, 23
    %s45 = scalar_lea.vmem %s0, %s44
    %v46 = vld [vmem:[%s45] sm:%s3]
    %s47 = scalar_lea.vmem [#allocation0], 184
    %48 = vst [vmem:[%s47] sm:%s3] %v46
    %s49 = smul.addr 2, 22
    %s50 = scalar_lea.vmem %s0, %s49
    %v51 = vld [vmem:[%s50] sm:%s3]
    %s52 = scalar_lea.vmem [#allocation0], 176
    %53 = vst [vmem:[%s52] sm:%s3] %v51
    %s54 = smul.addr 2, 21
    %s55 = scalar_lea.vmem %s0, %s54
    %v56 = vld [vmem:[%s55] sm:%s3]
    %s57 = scalar_lea.vmem [#allocation0], 168
    %58 = vst [vmem:[%s57] sm:%s3] %v56
    %s59 = smul.addr 2, 20
    %s60 = scalar_lea.vmem %s0, %s59
    %v61 = vld [vmem:[%s60] sm:%s3]
    %s62 = scalar_lea.vmem [#allocation0], 160
    %63 = vst [vmem:[%s62] sm:%s3] %v61
    %s64 = smul.addr 2, 19
    %s65 = scalar_lea.vmem %s0, %s64
    %v66 = vld [vmem:[%s65] sm:%s3]
    %s67 = scalar_lea.vmem [#allocation0], 152
    %68 = vst [vmem:[%s67] sm:%s3] %v66
    %s69 = smul.addr 2, 18
    %s70 = scalar_lea.vmem %s0, %s69
    %v71 = vld [vmem:[%s70] sm:%s3]
    %s72 = scalar_lea.vmem [#allocation0], 144
    %73 = vst [vmem:[%s72] sm:%s3] %v71
    %s74 = smul.addr 2, 17
    %s75 = scalar_lea.vmem %s0, %s74
    %v76 = vld [vmem:[%s75] sm:%s3]
    %s77 = scalar_lea.vmem [#allocation0], 136
    %78 = vst [vmem:[%s77] sm:%s3] %v76
    %s79 = smul.addr 2, 16
    %s80 = scalar_lea.vmem %s0, %s79
    %v81 = vld [vmem:[%s80] sm:%s3]
    %s82 = scalar_lea.vmem [#allocation0], 128
    %83 = vst [vmem:[%s82] sm:%s3] %v81
    %s84 = smul.addr 2, 15
    %s85 = scalar_lea.vmem %s0, %s84
    %v86 = vld [vmem:[%s85] sm:%s3]
    %s87 = scalar_lea.vmem [#allocation0], 120
    %88 = vst [vmem:[%s87] sm:%s3] %v86
    %s89 = smul.addr 2, 14
    %s90 = scalar_lea.vmem %s0, %s89
    %v91 = vld [vmem:[%s90] sm:%s3]
    %s92 = scalar_lea.vmem [#allocation0], 112
    %93 = vst [vmem:[%s92] sm:%s3] %v91
    %s94 = smul.addr 2, 13
    %s95 = scalar_lea.vmem %s0, %s94
    %v96 = vld [vmem:[%s95] sm:%s3]
    %s97 = scalar_lea.vmem [#allocation0], 104
    %98 = vst [vmem:[%s97] sm:%s3] %v96
    %s99 = smul.addr 2, 12
    %s100 = scalar_lea.vmem %s0, %s99
    %v101 = vld [vmem:[%s100] sm:%s3]
    %s102 = scalar_lea.vmem [#allocation0], 96
    %103 = vst [vmem:[%s102] sm:%s3] %v101
    %s104 = smul.addr 2, 11
    %s105 = scalar_lea.vmem %s0, %s104
    %v106 = vld [vmem:[%s105] sm:%s3]
    %s107 = scalar_lea.vmem [#allocation0], 88
    %108 = vst [vmem:[%s107] sm:%s3] %v106
    %s109 = smul.addr 2, 10
    %s110 = scalar_lea.vmem %s0, %s109
    %v111 = vld [vmem:[%s110] sm:%s3]
    %s112 = scalar_lea.vmem [#allocation0], 80
    %113 = vst [vmem:[%s112] sm:%s3] %v111
    %s114 = smul.addr 2, 9
    %s115 = scalar_lea.vmem %s0, %s114
    %v116 = vld [vmem:[%s115] sm:%s3]
    %s117 = scalar_lea.vmem [#allocation0], 72
    %118 = vst [vmem:[%s117] sm:%s3] %v116
    %s119 = smul.addr 2, 8
    %s120 = scalar_lea.vmem %s0, %s119
    %v121 = vld [vmem:[%s120] sm:%s3]
    %s122 = scalar_lea.vmem [#allocation0], 64
    %123 = vst [vmem:[%s122] sm:%s3] %v121
    %s124 = smul.addr 2, 7
    %s125 = scalar_lea.vmem %s0, %s124
    %v126 = vld [vmem:[%s125] sm:%s3]
    %s127 = scalar_lea.vmem [#allocation0], 56
    %128 = vst [vmem:[%s127] sm:%s3] %v126
    %s129 = smul.addr 2, 6
    %s130 = scalar_lea.vmem %s0, %s129
    %v131 = vld [vmem:[%s130] sm:%s3]
    %s132 = scalar_lea.vmem [#allocation0], 48
    %133 = vst [vmem:[%s132] sm:%s3] %v131
    %s134 = smul.addr 2, 5
    %s135 = scalar_lea.vmem %s0, %s134
    %v136 = vld [vmem:[%s135] sm:%s3]
    %s137 = scalar_lea.vmem [#allocation0], 40
    %138 = vst [vmem:[%s137] sm:%s3] %v136
    %s139 = smul.addr 2, 4
    %s140 = scalar_lea.vmem %s0, %s139
    %v141 = vld [vmem:[%s140] sm:%s3]
    %s142 = scalar_lea.vmem [#allocation0], 32
    %143 = vst [vmem:[%s142] sm:%s3] %v141
    %s144 = smul.addr 2, 3
    %s145 = scalar_lea.vmem %s0, %s144
    %v146 = vld [vmem:[%s145] sm:%s3]
    %s147 = scalar_lea.vmem [#allocation0], 24
    %148 = vst [vmem:[%s147] sm:%s3] %v146
    %s149 = smul.addr 2, 2
    %s150 = scalar_lea.vmem %s0, %s149
    %v151 = vld [vmem:[%s150] sm:%s3]
    %s152 = scalar_lea.vmem [#allocation0], 16
    %153 = vst [vmem:[%s152] sm:%s3] %v151
    %s154 = scalar_lea.vmem %s0, 2
    %v155 = vld [vmem:[%s154] sm:%s3]
    %s156 = scalar_lea.vmem [#allocation0], 8
    %157 = vst [vmem:[%s156] sm:%s3] %v155
    %v158 = vld [vmem:[%s0] sm:%s3]
    %159 = vst [vmem:[#allocation0] sm:%s3] %v158
    %v160 = vld [vmem:[#allocation0] ss:$8 sm:$0xf]
    %v161 = vld [vmem:[#allocation0] ss:$8 sm:$0xf0]
    %vm162 = vcmask 1047556
    %v163 = vsel %vm162, %v161, %v160
    %vm164 = vcmask 523264
    %165 = vst.msk [vmem:[%s1] sm:$0xff] %vm164, %v163
    %s166 = scalar_lea.vmem [#allocation0], 64
    %v167 = vld [vmem:[%s166] ss:$8 sm:$0xf]
    %s168 = scalar_lea.vmem [#allocation0], 64
    %v169 = vld [vmem:[%s168] ss:$8 sm:$0xf0]
    %vm170 = vcmask 1047556
    %v171 = vsel %vm170, %v169, %v167
    %vm172 = vcmask 523264
    %s173 = scalar_lea.vmem %s1, 8
    %174 = vst.msk [vmem:[%s173] sm:$0xff] %vm172, %v171
    %s175 = scalar_lea.vmem [#allocation0], 128
    %v176 = vld [vmem:[%s175] ss:$8 sm:$0xf]
    %s177 = scalar_lea.vmem [#allocation0], 128
    %v178 = vld [vmem:[%s177] ss:$8 sm:$0xf0]
    %vm179 = vcmask 1047556
    %v180 = vsel %vm179, %v178, %v176
    %vm181 = vcmask 523264
    %s182 = scalar_lea.vmem %s1, 16
    %183 = vst.msk [vmem:[%s182] sm:$0xff] %vm181, %v180
    %s184 = scalar_lea.vmem [#allocation0], 192
    %v185 = vld [vmem:[%s184] ss:$8 sm:$0xf]
    %s186 = scalar_lea.vmem [#allocation0], 192
    %v187 = vld [vmem:[%s186] ss:$8 sm:$0xf0]
    %vm188 = vcmask 1047556
    %v189 = vsel %vm188, %v187, %v185
    %vm190 = vcmask 523264
    %s191 = scalar_lea.vmem %s1, 24
    %192 = vst.msk [vmem:[%s191] sm:$0xff] %vm190, %v189
    %s193 = scalar_lea.vmem [#allocation0], 1
    %v194 = vld [vmem:[%s193] ss:$8 sm:$0xf]
    %s195 = scalar_lea.vmem [#allocation0], 1
    %v196 = vld [vmem:[%s195] ss:$8 sm:$0xf0]
    %vm197 = vcmask 1047556
    %v198 = vsel %vm197, %v196, %v194
    %199 = vrot.lane.b32.xlu0 %v198, 64
    %v200 = vpop.permute.xlu0 %199
    %vm201 = vcmask 1048064
    %202 = vst.msk [vmem:[%s1] sm:$0xff] %vm201, %v200
    %s203 = scalar_lea.vmem [#allocation0], 65
    %v204 = vld [vmem:[%s203] ss:$8 sm:$0xf]
    %s205 = scalar_lea.vmem [#allocation0], 65
    %v206 = vld [vmem:[%s205] ss:$8 sm:$0xf0]
    %vm207 = vcmask 1047556
    %v208 = vsel %vm207, %v206, %v204
    %209 = vrot.lane.b32.xlu0 %v208, 64
    %v210 = vpop.permute.xlu0 %209
    %vm211 = vcmask 1048064
    %s212 = scalar_lea.vmem %s1, 8
    %213 = vst.msk [vmem:[%s212] sm:$0xff] %vm211, %v210
    %s214 = scalar_lea.vmem [#allocation0], 129
    %v215 = vld [vmem:[%s214] ss:$8 sm:$0xf]
    %s216 = scalar_lea.vmem [#allocation0], 129
    %v217 = vld [vmem:[%s216] ss:$8 sm:$0xf0]
    %vm218 = vcmask 1047556
    %v219 = vsel %vm218, %v217, %v215
    %220 = vrot.lane.b32.xlu0 %v219, 64
    %v221 = vpop.permute.xlu0 %220
    %vm222 = vcmask 1048064
    %s223 = scalar_lea.vmem %s1, 16
    %224 = vst.msk [vmem:[%s223] sm:$0xff] %vm222, %v221
    %s225 = scalar_lea.vmem [#allocation0], 193
    %v226 = vld [vmem:[%s225] ss:$8 sm:$0xf]
    %s227 = scalar_lea.vmem [#allocation0], 193
    %v228 = vld [vmem:[%s227] ss:$8 sm:$0xf0]
    %vm229 = vcmask 1047556
    %v230 = vsel %vm229, %v228, %v226
    %231 = vrot.lane.b32.xlu0 %v230, 64
    %v232 = vpop.permute.xlu0 %231
    %vm233 = vcmask 1048064
    %s234 = scalar_lea.vmem %s1, 24
    %235 = vst.msk [vmem:[%s234] sm:$0xff] %vm233, %v232

// kernel: multimodal_projector.1
$region0: #{multimodal_projector.1}
  #allocation0 [shape = 'u32[]', space=smem, size = 0x4, offset = 0x4, fixed_abs, tag = 'smem constant byte address 0x4 - core index']
  #allocation1 [shape = 'u32[144,128]{1,0:T(1,128)}', space=vmem, size = 0x12000, scoped, tag = 'internal scratch']
  %s0 = inlined_call_operand.vmem [shape: f32[32,128], index: 0, kind: input, shape index: {}]
  %s1 = inlined_call_operand.vmem [shape: f32[128,32], index: 1, kind: input, shape index: {}]
  %s2 = inlined_call_operand.vmem [shape: f32[32,128], index: 2, kind: input, shape index: {}]
  %s3 = inlined_call_operand.vmem [shape: f32[16,128], index: 3, kind: output, shape index: {}]
  %s4 = sld [smem:[#allocation0]]
  $region22: #{multimodal_projector.1} parent=0
    _
  %s6 = ssub.s32 1, %s4
  %s7 = scalar_select 0, %s6, %s4
  // Predicated region
  $region2: #{multimodal_projector.1} parent=0 // pred_check
    _
  $region3: #{multimodal_projector.1} parent=0 // pred_check_branch
    %9 = sbr.rel (0) target = $region5
  $region4: #{multimodal_projector.1} parent=0 // pred_region
    _
  $region5: #{multimodal_projector.1} parent=0 // pred_fallthru
    _
  // Predicated region
  $region6: #{multimodal_projector.1} parent=0 // pred_check
    _
  $region7: #{multimodal_projector.1} parent=0 // pred_check_branch
    %11 = sbr.rel (0) target = $region9
  $region8: #{multimodal_projector.1} parent=0 // pred_region
    _
  $region9: #{multimodal_projector.1} parent=0 // pred_fallthru
    _
  // Predicated region
  $region10: #{multimodal_projector.1} parent=0 // pred_check
    _
  $region11: #{multimodal_projector.1} parent=0 // pred_check_branch
    %13 = sbr.rel (0) target = $region13
  $region12: #{multimodal_projector.1} parent=0 // pred_region
    _
  $region13: #{multimodal_projector.1} parent=0 // pred_fallthru
    _
  %v14 = vld [vmem:[%s0] sm:$0xff]
  %v15 = vld [vmem:[%s0 + $0x8] sm:$0xff]
  %v16 = vld [vmem:[%s0 + $0x10] sm:$0xff]
  %v17 = vld [vmem:[%s0 + $0x18] sm:$0xff]
  %v18 = vld [vmem:[%s1] sm:$0xff]
  %v19 = vld [vmem:[%s1 + $0x8] sm:$0xff]
  %v20 = vld [vmem:[%s1 + $0x10] sm:$0xff]
  %v21 = vld [vmem:[%s1 + $0x18] sm:$0xff]
  %v22 = vld [vmem:[%s1 + $0x20] sm:$0xff]
  %v23 = vld [vmem:[%s1 + $0x28] sm:$0xff]
  %v24 = vld [vmem:[%s1 + $0x30] sm:$0xff]
  %v25 = vld [vmem:[%s1 + $0x38] sm:$0xff]
  %v26 = vld [vmem:[%s1 + $0x40] sm:$0xff]
  %v27 = vld [vmem:[%s1 + $0x48] sm:$0xff]
  %v28 = vld [vmem:[%s1 + $0x50] sm:$0xff]
  %v29 = vld [vmem:[%s1 + $0x58] sm:$0xff]
  %v30 = vld [vmem:[%s1 + $0x60] sm:$0xff]
  %v31 = vld [vmem:[%s1 + $0x68] sm:$0xff]
  %v32 = vld [vmem:[%s1 + $0x70] sm:$0xff]
  %v33 = vld [vmem:[%s1 + $0x78] sm:$0xff]
  %34 = vmatprep.subr.mxu0 0.0
  %35 = vmatpush1.msra.mxu0 %v18
  %36 = vmatprep.subr.mxu0 0.0
  %37 = vmatpush1.msra.mxu0 %v19
  %38 = vmatprep.subr.mxu0 0.0
  %39 = vmatpush1.msra.mxu0 %v20
  %40 = vmatprep.subr.mxu0 0.0
  %41 = vmatpush1.msra.mxu0 %v21
  %42 = vmatprep.subr.mxu0 0.0
  %43 = vmatpush1.msra.mxu0 %v22
  %44 = vmatprep.subr.mxu0 0.0
  %45 = vmatpush1.msra.mxu0 %v23
  %46 = vmatprep.subr.mxu0 0.0
  %47 = vmatpush1.msra.mxu0 %v24
  %48 = vmatprep.subr.mxu0 0.0
  %49 = vmatpush1.msra.mxu0 %v25
  %50 = vmatprep.subr.mxu0 0.0
  %51 = vmatpush1.msra.mxu0 %v26
  %52 = vmatprep.subr.mxu0 0.0
  %53 = vmatpush1.msra.mxu0 %v27
  %54 = vmatprep.subr.mxu0 0.0
  %55 = vmatpush1.msra.mxu0 %v28
  %56 = vmatprep.subr.mxu0 0.0
  %57 = vmatpush1.msra.mxu0 %v29
  %58 = vmatprep.subr.mxu0 0.0
  %59 = vmatpush1.msra.mxu0 %v30
  %60 = vmatprep.subr.mxu0 0.0
  %61 = vmatpush1.msra.mxu0 %v31
  %62 = vmatprep.subr.mxu0 0.0
  %63 = vmatpush1.msra.mxu0 %v32
  %64 = vmatprep.subr.mxu0 0.0
  %65 = vmatpush1.msra.mxu0 %v33
  %66 = vmatprep.subr.mxu0 0.0
  %67 = vmatpush1.msra.mxu0 0.0
  %68 = vmatprep.subr.mxu0 0.0
  %69 = vmatpush1.msra.mxu0 0.0
  %70 = vmatprep.subr.mxu0 0.0
  %71 = vmatpush1.msra.mxu0 0.0
  %72 = vmatprep.subr.mxu0 0.0
  %73 = vmatpush1.msra.mxu0 0.0
  %74 = vmatprep.subr.mxu0 0.0
  %75 = vmatpush1.msra.mxu0 0.0
  %76 = vmatprep.subr.mxu0 0.0
  %77 = vmatpush1.msra.mxu0 0.0
  %78 = vmatprep.subr.mxu0 0.0
  %79 = vmatpush1.msra.mxu0 0.0
  %80 = vmatprep.subr.mxu0 0.0
  %81 = vmatpush1.msra.mxu0 0.0
  %82 = vmatprep.subr.mxu0 0.0
  %83 = vmatpush1.msra.mxu0 0.0
  %84 = vmatprep.subr.mxu0 0.0
  %85 = vmatpush1.msra.mxu0 0.0
  %86 = vmatprep.subr.mxu0 0.0
  %87 = vmatpush1.msra.mxu0 0.0
  %88 = vmatprep.subr.mxu0 0.0
  %89 = vmatpush1.msra.mxu0 0.0
  %90 = vmatprep.subr.mxu0 0.0
  %91 = vmatpush1.msra.mxu0 0.0
  %92 = vmatprep.subr.mxu0 0.0
  %93 = vmatpush1.msra.mxu0 0.0
  %94 = vmatprep.subr.mxu0 0.0
  %95 = vmatpush1.msra.mxu0 0.0
  %96 = vmatprep.subr.mxu0 0.0
  %97 = vmatpush1.msra.mxu0 0.0
  %98 = vmatprep.mubr.f32.mxu0 0.0
  %99 = vmatmul.mubr.f32.gmra.mrb[0].mxu0 %v14
  %v100 = vpop.f32.mrb[0].mxu0
  %v101 = vadd.f32 0.0, %v100
  %v102 = vpop.f32.mrb[0].mxu0
  %103 = vmatprep.mubr.f32.mxu0 0.0
  %104 = vmatmul.mubr.f32.gmra.mrb[0].mxu0 %v15
  %v105 = vpop.f32.mrb[0].mxu0
  %v106 = vadd.f32 0.0, %v105
  %v107 = vpop.f32.mrb[0].mxu0
  %108 = vmatprep.mubr.f32.mxu0 0.0
  %109 = vmatmul.mubr.f32.gmra.mrb[0].mxu0 %v16
  %v110 = vpop.f32.mrb[0].mxu0
  %v111 = vadd.f32 0.0, %v110
  %v112 = vpop.f32.mrb[0].mxu0
  %113 = vmatprep.mubr.f32.mxu0 0.0
  %114 = vmatmul.mubr.f32.gmra.mrb[0].mxu0 %v17
  %v115 = vpop.f32.mrb[0].mxu0
  %v116 = vadd.f32 0.0, %v115
  %v117 = vpop.f32.mrb[0].mxu0
  %118 = vdwg.mxu0
  %v119 = vmul.f32 %v101, %v101
  %v120 = vmul.f32 %v106, %v106
  %v121 = vmul.f32 %v111, %v111
  %v122 = vmul.f32 %v116, %v116
  %vm123 = vcmask 261120
  %v124 = vsel %vm123, %v119, 0.0
  %125 = vadd.xlane.f32.xlu0 %v124
  %v126 = vpop.xlane.xlu0 %125
  %v127 = vsel %vm123, %v120, 0.0
  %128 = vadd.xlane.f32.xlu0 %v127
  %v129 = vpop.xlane.xlu0 %128
  %v130 = vsel %vm123, %v121, 0.0
  %131 = vadd.xlane.f32.xlu0 %v130
  %v132 = vpop.xlane.xlu0 %131
  %v133 = vsel %vm123, %v122, 0.0
  %134 = vadd.xlane.f32.xlu0 %v133
  %v135 = vpop.xlane.xlu0 %134
  %v136 = vrcp.pop 32.0
  %v137 = vmul.f32 %v126, %v136
  %v138 = vmul.f32 %v129, %v136
  %v139 = vmul.f32 %v132, %v136
  %v140 = vmul.f32 %v135, %v136
  %v141 = vadd.f32 %v137, 1e-06
  %v142 = vadd.f32 %v138, 1e-06
  %v143 = vadd.f32 %v139, 1e-06
  %v144 = vadd.f32 %v140, 1e-06
  %v145 = vrsqrt.pop %v141
  %v146 = vrsqrt.pop %v142
  %v147 = vrsqrt.pop %v143
  %v148 = vrsqrt.pop %v144
  %v149 = vmul.f32 %v101, %v145
  %v150 = vmul.f32 %v106, %v146
  %v151 = vmul.f32 %v111, %v147
  %v152 = vmul.f32 %v116, %v148
  %v153 = vld [vmem:[%s2] sm:$0xff]
  %v154 = vld [vmem:[%s2 + $0x8] sm:$0xff]
  %v155 = vld [vmem:[%s2 + $0x10] sm:$0xff]
  %v156 = vld [vmem:[%s2 + $0x18] sm:$0xff]
  %v158 = vsel %vm123, %v149, 0
  %v161 = vsel %vm123, %v150, 0
  %v164 = vsel %vm123, %v151, 0
  %v167 = vsel %vm123, %v152, 0
  %169 = vmatprep.subr.mxu0 0.0
  %170 = vmatpush1.msra.mxu0 %v153
  %171 = vmatprep.subr.mxu0 0.0
  %172 = vmatpush1.msra.mxu0 %v154
  %173 = vmatprep.subr.mxu0 0.0
  %174 = vmatpush1.msra.mxu0 %v155
  %175 = vmatprep.subr.mxu0 0.0
  %176 = vmatpush1.msra.mxu0 %v156
  %177 = vmatprep.subr.mxu0 0.0
  %178 = vmatpush1.msra.mxu0 0.0
  %179 = vmatprep.subr.mxu0 0.0
  %180 = vmatpush1.msra.mxu0 0.0
  %181 = vmatprep.subr.mxu0 0.0
  %182 = vmatpush1.msra.mxu0 0.0
  %183 = vmatprep.subr.mxu0 0.0
  %184 = vmatpush1.msra.mxu0 0.0
  %185 = vmatprep.subr.mxu0 0.0
  %186 = vmatpush1.msra.mxu0 0.0
  %187 = vmatprep.subr.mxu0 0.0
  %188 = vmatpush1.msra.mxu0 0.0
  %189 = vmatprep.subr.mxu0 0.0
  %190 = vmatpush1.msra.mxu0 0.0
  %191 = vmatprep.subr.mxu0 0.0
  %192 = vmatpush1.msra.mxu0 0.0
  %193 = vmatprep.subr.mxu0 0.0
  %194 = vmatpush1.msra.mxu0 0.0
  %195 = vmatprep.subr.mxu0 0.0
  %196 = vmatpush1.msra.mxu0 0.0
  %197 = vmatprep.subr.mxu0 0.0
  %198 = vmatpush1.msra.mxu0 0.0
  %199 = vmatprep.subr.mxu0 0.0
  %200 = vmatpush1.msra.mxu0 0.0
  %201 = vmatprep.subr.mxu0 0.0
  %202 = vmatpush1.msra.mxu0 0.0
  %203 = vmatprep.subr.mxu0 0.0
  %204 = vmatpush1.msra.mxu0 0.0
  %205 = vmatprep.subr.mxu0 0.0
  %206 = vmatpush1.msra.mxu0 0.0
  %207 = vmatprep.subr.mxu0 0.0
  %208 = vmatpush1.msra.mxu0 0.0
  %209 = vmatprep.subr.mxu0 0.0
  %210 = vmatpush1.msra.mxu0 0.0
  %211 = vmatprep.subr.mxu0 0.0
  %212 = vmatpush1.msra.mxu0 0.0
  %213 = vmatprep.subr.mxu0 0.0
  %214 = vmatpush1.msra.mxu0 0.0
  %215 = vmatprep.subr.mxu0 0.0
  %216 = vmatpush1.msra.mxu0 0.0
  %217 = vmatprep.subr.mxu0 0.0
  %218 = vmatpush1.msra.mxu0 0.0
  %219 = vmatprep.subr.mxu0 0.0
  %220 = vmatpush1.msra.mxu0 0.0
  %221 = vmatprep.subr.mxu0 0.0
  %222 = vmatpush1.msra.mxu0 0.0
  %223 = vmatprep.subr.mxu0 0.0
  %224 = vmatpush1.msra.mxu0 0.0
  %225 = vmatprep.subr.mxu0 0.0
  %226 = vmatpush1.msra.mxu0 0.0
  %227 = vmatprep.subr.mxu0 0.0
  %228 = vmatpush1.msra.mxu0 0.0
  %229 = vmatprep.subr.mxu0 0.0
  %230 = vmatpush1.msra.mxu0 0.0
  %231 = vmatprep.subr.mxu0 0.0
  %232 = vmatpush1.msra.mxu0 0.0
  %233 = vmatprep.mubr.f32.mxu0 0.0
  %234 = vmatmul.mubr.f32.gmra.mrb[0].mxu0 %v158
  %v235 = vpop.f32.mrb[0].mxu0
  %v236 = vadd.f32 0.0, %v235
  %v237 = vpop.f32.mrb[0].mxu0
  %238 = vmatprep.mubr.f32.mxu0 0.0
  %239 = vmatmul.mubr.f32.gmra.mrb[0].mxu0 %v161
  %v240 = vpop.f32.mrb[0].mxu0
  %v241 = vadd.f32 0.0, %v240
  %v242 = vpop.f32.mrb[0].mxu0
  %243 = vmatprep.mubr.f32.mxu0 0.0
  %244 = vmatmul.mubr.f32.gmra.mrb[0].mxu0 %v164
  %v245 = vpop.f32.mrb[0].mxu0
  %v246 = vadd.f32 0.0, %v245
  %v247 = vpop.f32.mrb[0].mxu0
  %248 = vmatprep.mubr.f32.mxu0 0.0
  %249 = vmatmul.mubr.f32.gmra.mrb[0].mxu0 %v167
  %v250 = vpop.f32.mrb[0].mxu0
  %v251 = vadd.f32 0.0, %v250
  %v252 = vpop.f32.mrb[0].mxu0
  %253 = vdwg.mxu0
  %v254 = vlaneseq
  %v255 = vand.u32 %v254, 127
  %vm256 = vcmp.ge.s32.totalorder %v255, 64
  %v257 = vsel %vm256, %v246, %v236
  %v258 = vsel %vm256, %v251, %v241
  %259 = vst [vmem:[%s3] sm:$0xff] %v257
  %260 = vst [vmem:[%s3 + $0x8] sm:$0xff] %v258
  // Predicated region
  $region14: #{multimodal_projector.1} parent=0 // pred_check
    _
  $region15: #{multimodal_projector.1} parent=0 // pred_check_branch
    %262 = sbr.rel (0) target = $region17
  $region16: #{multimodal_projector.1} parent=0 // pred_region
    _
  $region17: #{multimodal_projector.1} parent=0 // pred_fallthru
    _
  // Predicated region
  $region18: #{multimodal_projector.1} parent=0 // pred_check
    _
  $region19: #{multimodal_projector.1} parent=0 // pred_check_branch
    %264 = sbr.rel (0) target = $region21
  $region20: #{multimodal_projector.1} parent=0 // pred_region
    _
  $region21: #{multimodal_projector.1} parent=0 // pred_fallthru
    _

</llo_original>
